<compile_context>
chip_gen: v7x
topology: tpu7x:2x2x1
jax: 0.10.0
libtpu: 0.0.40
codegen_flags: <defaults>
</compile_context>

<pallas_src>
import jax
import jax.numpy as jnp
from jax.experimental import pallas as pl
from jax.experimental.pallas import tpu as pltpu


# --------------------------------------------------------------------------- #
# Kernels
# --------------------------------------------------------------------------- #

def _ffn_resident_kernel(x_ref, w1_ref, b1_ref, w2_ref, b2_ref, o_ref):
    # x_ref: (TM, C), w1_ref: (C, H), b1_ref: (1, H), w2_ref: (H, C),
    # b2_ref: (1, C), o_ref: (TM, C).  Weights are grid-invariant (resident).
    h = jnp.dot(x_ref[...], w1_ref[...], preferred_element_type=jnp.float32)
    h = jnp.maximum(h + b1_ref[...].astype(jnp.float32), 0.0)
    y = jnp.dot(h.astype(w2_ref.dtype), w2_ref[...],
                preferred_element_type=jnp.float32)
    o_ref[...] = (y + b2_ref[...].astype(jnp.float32)).astype(o_ref.dtype)


def _ffn_tiled_kernel(x_ref, w1_ref, b1_ref, w2_ref, b2_ref, o_ref, acc_ref):
    # x_ref: (TM, C), w1_ref: (C, TH), b1_ref: (1, TH), w2_ref: (TH, C),
    # b2_ref: (1, C), o_ref/acc_ref: (TM, C).  Hidden dim streamed in TH slices.
    j = pl.program_id(1)

    @pl.when(j == 0)
    def _():
        acc_ref[...] = jnp.zeros_like(acc_ref)

    h = jnp.dot(x_ref[...], w1_ref[...], preferred_element_type=jnp.float32)
    h = jnp.maximum(h + b1_ref[...].astype(jnp.float32), 0.0)
    acc_ref[...] += jnp.dot(h.astype(w2_ref.dtype), w2_ref[...],
                            preferred_element_type=jnp.float32)

    @pl.when(j == pl.num_programs(1) - 1)
    def _():
        # b2 is added exactly once, at finalize.
        o_ref[...] = (acc_ref[...]
                      + b2_ref[...].astype(jnp.float32)).astype(o_ref.dtype)


# --------------------------------------------------------------------------- #
# Tiling / budget helpers
# --------------------------------------------------------------------------- #

def _pick_tm(M, candidates=(1024, 512, 256, 128)):
    """Largest candidate dividing M that still yields >= 2 M tiles (keeps both
    v7x TensorCores busy on the 'parallel' axis); else largest divisor; else M."""
    divisors = [c for c in candidates if M >= c and M % c == 0]
    for c in divisors:
        if M // c >= 2:
            return c
    if divisors:
        return divisors[0]
    return M


def _pick_th(H, candidates=(1024, 512, 256, 128)):
    for c in candidates:
        if H >= c and H % c == 0:
            return c
    return H


def _vmem_budget_bytes():
    """Usable VMEM budget per generation (leave headroom for compiler scratch)."""
    cap = None
    try:
        cap = getattr(pltpu.get_tpu_info(), "vmem_capacity_bytes", None)
    except Exception:
        cap = None
    if cap is None:
        return 48 * 1024 * 1024          # unknown: assume v7x-sized (64 MiB/TC)
    if cap <= 64 * 1024 * 1024:
        return 48 * 1024 * 1024          # v7x
    return 100 * 1024 * 1024             # v5e / v6e (128 MiB physical)


# --------------------------------------------------------------------------- #
# Wrapper
# --------------------------------------------------------------------------- #

def feedforward(x, w1, b1, w2, b2, *, tm=None, th=None,
                compute_dtype=jnp.bfloat16, _force_tiled=False):
    """x: (B, T, C).  w1: (C, H), b1: (H,), w2: (H, C), b2: (C,) with H = 4*C.

    compute_dtype: dtype fed to the MXU (bf16 = fast path on all generations).
    Output dtype matches x.dtype.  Accumulation is always f32.
    """
    B, T, C = x.shape
    H = w1.shape[1]
    assert w1.shape == (C, H) and b1.shape == (H,)
    assert w2.shape == (H, C) and b2.shape == (C,)
    M = B * T
    out_dtype = x.dtype
    if compute_dtype is None:
        compute_dtype = x.dtype

    x2 = x.reshape(M, C).astype(compute_dtype)
    w1c = w1.astype(compute_dtype)
    w2c = w2.astype(compute_dtype)
    # Biases stay f32: added in f32 inside the kernel, DMA cost negligible.
    b1_2d = b1.reshape(1, H).astype(jnp.float32)
    b2_2d = b2.reshape(1, C).astype(jnp.float32)

    if tm is None:
        tm = _pick_tm(M)
    else:
        assert M % tm == 0, f"tm={tm} must divide M={M} (no tail handling)"

    cbytes = jnp.dtype(compute_dtype).itemsize
    budget = _vmem_budget_bytes()

    flops = 4 * M * C * H  # two matmuls

    # ---- Resident-weights path: weights read from HBM exactly once. ----------
    resident_bytes = (
        2 * 2 * tm * C * cbytes              # x-in + out tiles, double-buffered
        + 2 * (C * H + H * C) * cbytes       # W1 + W2 blocks (counted x2 to be safe)
        + 2 * (H + C) * 4                    # biases (f32)
        + tm * H * 4 + tm * H * cbytes       # h (f32) + compute-dtype copy for MXU
        + tm * C * 4                         # f32 second-matmul result
    )
    use_resident = (not _force_tiled) and resident_bytes <= budget

    if use_resident:
        grid = (M // tm,)
        vmem_limit = int(min(budget,
                             max(resident_bytes + resident_bytes // 4,
                                 32 * 1024 * 1024)))
        cost = pl.CostEstimate(
            flops=flops, transcendentals=0,
            bytes_accessed=(2 * M * C + C * H + H * C) * cbytes + (H + C) * 4,
        )
        out = pl.pallas_call(
            _ffn_resident_kernel,
            out_shape=jax.ShapeDtypeStruct((M, C), out_dtype),
            grid=grid,
            in_specs=[
                pl.BlockSpec((tm, C), lambda i: (i, 0)),   # x tile
                pl.BlockSpec((C, H), lambda i: (0, 0)),    # W1: resident
                pl.BlockSpec((1, H), lambda i: (0, 0)),    # b1: resident
                pl.BlockSpec((H, C), lambda i: (0, 0)),    # W2: resident
                pl.BlockSpec((1, C), lambda i: (0, 0)),    # b2: resident
            ],
            out_specs=pl.BlockSpec((tm, C), lambda i: (i, 0)),
            compiler_params=pltpu.CompilerParams(
                dimension_semantics=("parallel",),
                vmem_limit_bytes=vmem_limit),
            cost_estimate=cost,
        )(x2, w1c, b1_2d, w2c, b2_2d)
        return out.reshape(B, T, C)

    # ---- Fallback: stream the hidden dimension (weights too big for VMEM). ---
    if th is None:
        th = _pick_th(H)
    else:
        assert H % th == 0, f"th={th} must divide H={H} (no tail handling)"
    grid = (M // tm, H // th)

    tiled_bytes = (
        2 * 2 * tm * C * cbytes              # x-in + out tiles, double-buffered
        + 2 * (C * th + th * C) * cbytes     # W1/W2 hidden slices, double-buffered
        + 2 * (th + C) * 4                   # bias slices (f32)
        + tm * th * 4 + tm * th * cbytes     # h (f32) + compute-dtype copy
        + tm * C * 4                         # f32 accumulator scratch
    )
    vmem_limit = int(min(budget,
                         max(tiled_bytes + tiled_bytes // 4, 32 * 1024 * 1024)))
    cost = pl.CostEstimate(
        flops=flops, transcendentals=0,
        bytes_accessed=(2 * M * C) * cbytes
                       + (M // tm) * ((C * H + H * C) * cbytes + (H + C) * 4),
    )
    out = pl.pallas_call(
        _ffn_tiled_kernel,
        out_shape=jax.ShapeDtypeStruct((M, C), out_dtype),
        grid=grid,
        in_specs=[
            pl.BlockSpec((tm, C), lambda i, j: (i, 0)),   # x tile: resident along H
            pl.BlockSpec((C, th), lambda i, j: (0, j)),   # W1 hidden slice
            pl.BlockSpec((1, th), lambda i, j: (0, j)),   # b1 hidden slice
            pl.BlockSpec((th, C), lambda i, j: (j, 0)),   # W2 hidden slice
            pl.BlockSpec((1, C), lambda i, j: (0, 0)),    # b2: resident
        ],
        out_specs=pl.BlockSpec((tm, C), lambda i, j: (i, 0)),  # invariant along H
        scratch_shapes=[pltpu.VMEM((tm, C), jnp.float32)],
        compiler_params=pltpu.CompilerParams(
            dimension_semantics=("parallel", "arbitrary"),
            vmem_limit_bytes=vmem_limit),
        cost_estimate=cost,
    )(x2, w1c, b1_2d, w2c, b2_2d)
    return out.reshape(B, T, C)


# --------------------------------------------------------------------------- #
# Reference & demo
# --------------------------------------------------------------------------- #

def init_params(key, n_embd, dtype=jnp.float32):
    """Deterministic init mimicking nn.Linear default (uniform +-1/sqrt(fan_in))."""
    h = 4 * n_embd
    k1, k2, k3, k4 = jax.random.split(key, 4)
    lim1 = 1.0 / jnp.sqrt(n_embd)
    lim2 = 1.0 / jnp.sqrt(h)
    w1 = jax.random.uniform(k1, (n_embd, h), jnp.float32, -lim1, lim1).astype(dtype)
    b1 = jax.random.uniform(k2, (h,), jnp.float32, -lim1, lim1).astype(dtype)
    w2 = jax.random.uniform(k3, (h, n_embd), jnp.float32, -lim2, lim2).astype(dtype)
    b2 = jax.random.uniform(k4, (n_embd,), jnp.float32, -lim2, lim2).astype(dtype)
    return w1, b1, w2, b2


def _ref(x, w1, b1, w2, b2):
    B, T, C = x.shape
    h = jnp.maximum(x.reshape(-1, C).astype(jnp.float32) @ w1.astype(jnp.float32)
                    + b1.astype(jnp.float32), 0.0)
    y = h @ w2.astype(jnp.float32) + b2.astype(jnp.float32)
    return y.reshape(B, T, C).astype(x.dtype)


if __name__ == "__main__":
    # 1) Small demo consistent with the PyTorch module: x is (batch, seq, n_embd).
    #    f32 compute path -> tight tolerance against the f32 reference.
    B, T, n_embd = 2, 8, 32          # hidden = 4 * n_embd = 128
    dropout = 0.1                    # identity at inference

    key = jax.random.PRNGKey(0)
    kx, kp = jax.random.split(key)
    x = jax.random.normal(kx, (B, T, n_embd), jnp.float32)
    w1, b1, w2, b2 = init_params(kp, n_embd)

    y = jax.block_until_ready(
        feedforward(x, w1, b1, w2, b2, compute_dtype=jnp.float32))
    assert y.shape == (B, T, n_embd)
    assert jnp.allclose(y, _ref(x, w1, b1, w2, b2), atol=1e-5, rtol=1e-5)

    # 2) Larger check on the default bf16 fast path (resident-weights 1-D grid,
    #    >= 2 M tiles so both v7x TCs get work).
    B2, T2, C2 = 2, 256, 256         # M = 512, H = 1024
    kx2, kp2 = jax.random.split(jax.random.PRNGKey(1))
    xb = jax.random.normal(kx2, (B2, T2, C2), jnp.float32)
    pb = init_params(kp2, C2)
    yb = jax.block_until_ready(feedforward(xb, *pb))
    assert yb.shape == (B2, T2, C2)
    assert jnp.allclose(yb, _ref(xb, *pb), atol=3e-2, rtol=3e-2)

    # 3) Exercise the H-tiled fallback (accumulator) path for correctness.
    yt = jax.block_until_ready(
        feedforward(xb, *pb, tm=128, th=512, _force_tiled=True))
    assert jnp.allclose(yt, _ref(xb, *pb), atol=3e-2, rtol=3e-2)

    print("KERNEL_OK")
</pallas_src>

<mosaic_0001>
module attributes {stable_mosaic.version = 11 : i64} {
  func.func @_ffn_resident_kernel(%arg0: i32, %arg1: memref<16x32xf32, #tpu.memory_space<vmem>>, %arg2: memref<32x128xf32, #tpu.memory_space<vmem>>, %arg3: memref<1x128xf32, #tpu.memory_space<vmem>>, %arg4: memref<128x32xf32, #tpu.memory_space<vmem>>, %arg5: memref<1x32xf32, #tpu.memory_space<vmem>>, %arg6: memref<16x32xf32, #tpu.memory_space<vmem>>) attributes {dimension_semantics = [#tpu.dimension_semantics<parallel>], iteration_bounds = array<i64: 1>, scalar_prefetch = 0 : i64, scratch_operands = 0 : i64, tpu.core_type = #tpu.core_type<tc>, window_params = [{transform_indices = @transform_0, window_bounds = array<i64: 16, 32>}, {pipeline_mode = #tpu.pipeline_mode<synchronous>, transform_indices = @transform_1, window_bounds = array<i64: 32, 128>}, {pipeline_mode = #tpu.pipeline_mode<synchronous>, transform_indices = @transform_2, window_bounds = array<i64: 1, 128>}, {pipeline_mode = #tpu.pipeline_mode<synchronous>, transform_indices = @transform_3, window_bounds = array<i64: 128, 32>}, {pipeline_mode = #tpu.pipeline_mode<synchronous>, transform_indices = @transform_4, window_bounds = array<i64: 1, 32>}, {transform_indices = @transform_5, window_bounds = array<i64: 16, 32>}]} {
    %c0 = arith.constant 0 : index
    %c0_0 = arith.constant 0 : index
    %0 = vector.load %arg1[%c0, %c0_0] : memref<16x32xf32, #tpu.memory_space<vmem>>, vector<16x32xf32>
    %c0_1 = arith.constant 0 : index
    %c0_2 = arith.constant 0 : index
    %1 = vector.load %arg2[%c0_1, %c0_2] : memref<32x128xf32, #tpu.memory_space<vmem>>, vector<32x128xf32>
    %cst = arith.constant dense<0.000000e+00> : vector<16x128xf32>
    %2 = tpu.matmul %0, %1, %cst {dimension_numbers = #tpu.dot_dimension_numbers<[1], [0], [0], [1], [0, 0, 1, 1], [], []>} : vector<16x32xf32>, vector<32x128xf32>, vector<16x128xf32> -> vector<16x128xf32>
    %c0_3 = arith.constant 0 : index
    %c0_4 = arith.constant 0 : index
    %3 = vector.load %arg3[%c0_3, %c0_4] : memref<1x128xf32, #tpu.memory_space<vmem>>, vector<1x128xf32>
    %4 = vector.broadcast %3 : vector<1x128xf32> to vector<16x128xf32>
    %5 = arith.addf %2, %4 : vector<16x128xf32>
    %cst_5 = arith.constant 0.000000e+00 : f32
    %6 = vector.broadcast %cst_5 : f32 to vector<16x128xf32>
    %7 = arith.maximumf %5, %6 : vector<16x128xf32>
    %c0_6 = arith.constant 0 : index
    %c0_7 = arith.constant 0 : index
    %8 = vector.load %arg4[%c0_6, %c0_7] : memref<128x32xf32, #tpu.memory_space<vmem>>, vector<128x32xf32>
    %cst_8 = arith.constant dense<0.000000e+00> : vector<16x32xf32>
    %9 = tpu.matmul %7, %8, %cst_8 {dimension_numbers = #tpu.dot_dimension_numbers<[1], [0], [0], [1], [0, 0, 1, 1], [], []>} : vector<16x128xf32>, vector<128x32xf32>, vector<16x32xf32> -> vector<16x32xf32>
    %c0_9 = arith.constant 0 : index
    %c0_10 = arith.constant 0 : index
    %10 = vector.load %arg5[%c0_9, %c0_10] : memref<1x32xf32, #tpu.memory_space<vmem>>, vector<1x32xf32>
    %11 = vector.broadcast %10 : vector<1x32xf32> to vector<16x32xf32>
    %12 = arith.addf %9, %11 : vector<16x32xf32>
    %c0_11 = arith.constant 0 : index
    %c0_12 = arith.constant 0 : index
    %13 = vector.load %arg6[%c0_11, %c0_12] : memref<16x32xf32, #tpu.memory_space<vmem>>, vector<16x32xf32>
    tpu.vector_store %arg6[%c0_11, %c0_12], %12 {strides = array<i32>} : memref<16x32xf32, #tpu.memory_space<vmem>>, vector<16x32xf32>,
    return
  }
  func.func @transform_0(%arg0: i32) -> (i32, i32) {
    %c0_i32 = arith.constant 0 : i32
    %c0_i32_0 = arith.constant 0 : i32
    return %arg0, %c0_i32 : i32, i32
  }
  func.func @transform_1(%arg0: i32) -> (i32, i32) {
    %c0_i32 = arith.constant 0 : i32
    %c0_i32_0 = arith.constant 0 : i32
    %c0_i32_1 = arith.constant 0 : i32
    return %c0_i32, %c0_i32_0 : i32, i32
  }
  func.func @transform_2(%arg0: i32) -> (i32, i32) {
    %c0_i32 = arith.constant 0 : i32
    %c0_i32_0 = arith.constant 0 : i32
    %c0_i32_1 = arith.constant 0 : i32
    return %c0_i32, %c0_i32_0 : i32, i32
  }
  func.func @transform_3(%arg0: i32) -> (i32, i32) {
    %c0_i32 = arith.constant 0 : i32
    %c0_i32_0 = arith.constant 0 : i32
    %c0_i32_1 = arith.constant 0 : i32
    return %c0_i32, %c0_i32_0 : i32, i32
  }
  func.func @transform_4(%arg0: i32) -> (i32, i32) {
    %c0_i32 = arith.constant 0 : i32
    %c0_i32_0 = arith.constant 0 : i32
    %c0_i32_1 = arith.constant 0 : i32
    return %c0_i32, %c0_i32_0 : i32, i32
  }
  func.func @transform_5(%arg0: i32) -> (i32, i32) {
    %c0_i32 = arith.constant 0 : i32
    %c0_i32_0 = arith.constant 0 : i32
    return %arg0, %c0_i32 : i32, i32
  }
}

</mosaic_0001>

<llo_original>
// kernel: tpu_custom_call.1
$region0: #{tpu_custom_call.1}
  #allocation0 [shape = 'u32[]', space=smem, size = 0x4, offset = 0x4, fixed_abs, tag = 'smem constant byte address 0x4 - core index']
  #allocation1 [shape = 'u32[144,128]{1,0:T(1,128)}', space=vmem, size = 0x12000, scoped, tag = 'internal scratch']
  %s0 = inlined_call_operand.vmem [shape: f32[16,32], index: 0, kind: input, shape index: {}]
  %s1 = inlined_call_operand.vmem [shape: f32[32,128], index: 1, kind: input, shape index: {}]
  %s2 = inlined_call_operand.vmem [shape: f32[1,128], index: 2, kind: input, shape index: {}]
  %s3 = inlined_call_operand.vmem [shape: f32[128,32], index: 3, kind: input, shape index: {}]
  %s4 = inlined_call_operand.vmem [shape: f32[1,32], index: 4, kind: input, shape index: {}]
  %s5 = inlined_call_operand.hbm [shape: f32[16,32], index: 5, kind: output, shape index: {}]
  %s6 = sld [smem:[#allocation0]]
  $region30: #{tpu_custom_call.1} parent=0
    _
  %s8 = ssub.s32 1, %s6
  %s9 = scalar_select 0, %s8, %s6
  $region1: #{tpu_custom_call.1} parent=0
    #allocation2 [shape = 'u8[8192]{0}', space=vmem, size = 0x2000, scoped, tag = 'output window, operand 0, single buffered']
    #allocation3 [shape = 's32[1]{0}', space=sflag, size = 0x4, scoped, tag = 'scoped memory for tpu_custom_call.1']
    %10 = vsyncpa [#allocation3], 0
    // Predicated region
    $region2: #{tpu_custom_call.1} parent=1 // pred_check
      _
    $region3: #{tpu_custom_call.1} parent=1 // pred_check_branch
      %12 = sbr.rel (0) target = $region5
    $region4: #{tpu_custom_call.1} parent=1 // pred_region
      _
    $region5: #{tpu_custom_call.1} parent=1 // pred_fallthru
      _
    // Predicated region
    $region6: #{tpu_custom_call.1} parent=1 // pred_check
      _
    $region7: #{tpu_custom_call.1} parent=1 // pred_check_branch
      %14 = sbr.rel (0) target = $region9
    $region8: #{tpu_custom_call.1} parent=1 // pred_region
      _
    $region9: #{tpu_custom_call.1} parent=1 // pred_fallthru
      _
    // Predicated region
    $region10: #{tpu_custom_call.1} parent=1 // pred_check
      _
    $region11: #{tpu_custom_call.1} parent=1 // pred_check_branch
      %16 = sbr.rel (0) target = $region13
    $region12: #{tpu_custom_call.1} parent=1 // pred_region
      _
    $region13: #{tpu_custom_call.1} parent=1 // pred_fallthru
      _
    // Predicated region
    $region14: #{tpu_custom_call.1} parent=1 // pred_check
      _
    $region15: #{tpu_custom_call.1} parent=1 // pred_check_branch
      %18 = sbr.rel (0) target = $region17
    $region16: #{tpu_custom_call.1} parent=1 // pred_region
      _
    $region17: #{tpu_custom_call.1} parent=1 // pred_fallthru
      _
    // Predicated region
    $region18: #{tpu_custom_call.1} parent=1 // pred_check
      _
    $region19: #{tpu_custom_call.1} parent=1 // pred_check_branch
      %20 = sbr.rel (0) target = $region21
    $region20: #{tpu_custom_call.1} parent=1 // pred_region
      _
    $region21: #{tpu_custom_call.1} parent=1 // pred_fallthru
      _
    %v21 = vld [vmem:[%s0] sm:$0xff]
    %v22 = vld [vmem:[%s0 + $0x8] sm:$0xff]
    %v23 = vld [vmem:[%s1] sm:$0xff]
    %v24 = vld [vmem:[%s1 + $0x8] sm:$0xff]
    %v25 = vld [vmem:[%s1 + $0x10] sm:$0xff]
    %v26 = vld [vmem:[%s1 + $0x18] sm:$0xff]
    %v27 = vld [vmem:[%s2] sm:$0x1]
    %v29 = vlaneseq
    %v30 = vshrl.u32 %v29, 7
    %v31 = vsub.s32 0, %v30
    %v32 = vrot.slane %v27, %v31
    %vm34 = vcmask 261120
    %v36 = vsel %vm34, %v21, 0
    %v39 = vsel %vm34, %v22, 0
    %41 = vmatprep.subr.mxu0 0.0
    %42 = vmatpush1.msra.mxu0 %v23
    %43 = vmatprep.subr.mxu0 0.0
    %44 = vmatpush1.msra.mxu0 %v24
    %45 = vmatprep.subr.mxu0 0.0
    %46 = vmatpush1.msra.mxu0 %v25
    %47 = vmatprep.subr.mxu0 0.0
    %48 = vmatpush1.msra.mxu0 %v26
    %49 = vmatprep.subr.mxu0 0.0
    %50 = vmatpush1.msra.mxu0 0.0
    %51 = vmatprep.subr.mxu0 0.0
    %52 = vmatpush1.msra.mxu0 0.0
    %53 = vmatprep.subr.mxu0 0.0
    %54 = vmatpush1.msra.mxu0 0.0
    %55 = vmatprep.subr.mxu0 0.0
    %56 = vmatpush1.msra.mxu0 0.0
    %57 = vmatprep.subr.mxu0 0.0
    %58 = vmatpush1.msra.mxu0 0.0
    %59 = vmatprep.subr.mxu0 0.0
    %60 = vmatpush1.msra.mxu0 0.0
    %61 = vmatprep.subr.mxu0 0.0
    %62 = vmatpush1.msra.mxu0 0.0
    %63 = vmatprep.subr.mxu0 0.0
    %64 = vmatpush1.msra.mxu0 0.0
    %65 = vmatprep.subr.mxu0 0.0
    %66 = vmatpush1.msra.mxu0 0.0
    %67 = vmatprep.subr.mxu0 0.0
    %68 = vmatpush1.msra.mxu0 0.0
    %69 = vmatprep.subr.mxu0 0.0
    %70 = vmatpush1.msra.mxu0 0.0
    %71 = vmatprep.subr.mxu0 0.0
    %72 = vmatpush1.msra.mxu0 0.0
    %73 = vmatprep.subr.mxu0 0.0
    %74 = vmatpush1.msra.mxu0 0.0
    %75 = vmatprep.subr.mxu0 0.0
    %76 = vmatpush1.msra.mxu0 0.0
    %77 = vmatprep.subr.mxu0 0.0
    %78 = vmatpush1.msra.mxu0 0.0
    %79 = vmatprep.subr.mxu0 0.0
    %80 = vmatpush1.msra.mxu0 0.0
    %81 = vmatprep.subr.mxu0 0.0
    %82 = vmatpush1.msra.mxu0 0.0
    %83 = vmatprep.subr.mxu0 0.0
    %84 = vmatpush1.msra.mxu0 0.0
    %85 = vmatprep.subr.mxu0 0.0
    %86 = vmatpush1.msra.mxu0 0.0
    %87 = vmatprep.subr.mxu0 0.0
    %88 = vmatpush1.msra.mxu0 0.0
    %89 = vmatprep.subr.mxu0 0.0
    %90 = vmatpush1.msra.mxu0 0.0
    %91 = vmatprep.subr.mxu0 0.0
    %92 = vmatpush1.msra.mxu0 0.0
    %93 = vmatprep.subr.mxu0 0.0
    %94 = vmatpush1.msra.mxu0 0.0
    %95 = vmatprep.subr.mxu0 0.0
    %96 = vmatpush1.msra.mxu0 0.0
    %97 = vmatprep.subr.mxu0 0.0
    %98 = vmatpush1.msra.mxu0 0.0
    %99 = vmatprep.subr.mxu0 0.0
    %100 = vmatpush1.msra.mxu0 0.0
    %101 = vmatprep.subr.mxu0 0.0
    %102 = vmatpush1.msra.mxu0 0.0
    %103 = vmatprep.subr.mxu0 0.0
    %104 = vmatpush1.msra.mxu0 0.0
    %105 = vmatprep.mubr.f32.mxu0 0.0
    %106 = vmatmul.mubr.f32.gmra.mrb[0].mxu0 %v36
    %v107 = vpop.f32.mrb[0].mxu0
    %v108 = vadd.f32 %v32, %v107
    %v109 = vpop.f32.mrb[0].mxu0
    %110 = vmatprep.mubr.f32.mxu0 0.0
    %111 = vmatmul.mubr.f32.gmra.mrb[0].mxu0 %v39
    %v112 = vpop.f32.mrb[0].mxu0
    %v113 = vadd.f32 %v32, %v112
    %v114 = vpop.f32.mrb[0].mxu0
    %115 = vdwg.mxu0
    %v116 = vmax.f32 %v108, 0.0
    %v117 = vmax.f32 %v113, 0.0
    %v118 = vld [vmem:[%s3] sm:$0xff]
    %v119 = vld [vmem:[%s3 + $0x8] sm:$0xff]
    %v120 = vld [vmem:[%s3 + $0x10] sm:$0xff]
    %v121 = vld [vmem:[%s3 + $0x18] sm:$0xff]
    %v122 = vld [vmem:[%s3 + $0x20] sm:$0xff]
    %v123 = vld [vmem:[%s3 + $0x28] sm:$0xff]
    %v124 = vld [vmem:[%s3 + $0x30] sm:$0xff]
    %v125 = vld [vmem:[%s3 + $0x38] sm:$0xff]
    %v126 = vld [vmem:[%s3 + $0x40] sm:$0xff]
    %v127 = vld [vmem:[%s3 + $0x48] sm:$0xff]
    %v128 = vld [vmem:[%s3 + $0x50] sm:$0xff]
    %v129 = vld [vmem:[%s3 + $0x58] sm:$0xff]
    %v130 = vld [vmem:[%s3 + $0x60] sm:$0xff]
    %v131 = vld [vmem:[%s3 + $0x68] sm:$0xff]
    %v132 = vld [vmem:[%s3 + $0x70] sm:$0xff]
    %v133 = vld [vmem:[%s3 + $0x78] sm:$0xff]
    %v134 = vld [vmem:[%s4] sm:$0x1]
    %v136 = vlaneseq
    %v137 = vshrl.u32 %v136, 7
    %v138 = vsub.s32 0, %v137
    %v139 = vrot.slane %v134, %v138
    %141 = vmatprep.subr.mxu0 0.0
    %142 = vmatpush1.msra.mxu0 %v118
    %143 = vmatprep.subr.mxu0 0.0
    %144 = vmatpush1.msra.mxu0 %v119
    %145 = vmatprep.subr.mxu0 0.0
    %146 = vmatpush1.msra.mxu0 %v120
    %147 = vmatprep.subr.mxu0 0.0
    %148 = vmatpush1.msra.mxu0 %v121
    %149 = vmatprep.subr.mxu0 0.0
    %150 = vmatpush1.msra.mxu0 %v122
    %151 = vmatprep.subr.mxu0 0.0
    %152 = vmatpush1.msra.mxu0 %v123
    %153 = vmatprep.subr.mxu0 0.0
    %154 = vmatpush1.msra.mxu0 %v124
    %155 = vmatprep.subr.mxu0 0.0
    %156 = vmatpush1.msra.mxu0 %v125
    %157 = vmatprep.subr.mxu0 0.0
    %158 = vmatpush1.msra.mxu0 %v126
    %159 = vmatprep.subr.mxu0 0.0
    %160 = vmatpush1.msra.mxu0 %v127
    %161 = vmatprep.subr.mxu0 0.0
    %162 = vmatpush1.msra.mxu0 %v128
    %163 = vmatprep.subr.mxu0 0.0
    %164 = vmatpush1.msra.mxu0 %v129
    %165 = vmatprep.subr.mxu0 0.0
    %166 = vmatpush1.msra.mxu0 %v130
    %167 = vmatprep.subr.mxu0 0.0
    %168 = vmatpush1.msra.mxu0 %v131
    %169 = vmatprep.subr.mxu0 0.0
    %170 = vmatpush1.msra.mxu0 %v132
    %171 = vmatprep.subr.mxu0 0.0
    %172 = vmatpush1.msra.mxu0 %v133
    %173 = vmatprep.subr.mxu0 0.0
    %174 = vmatpush1.msra.mxu0 0.0
    %175 = vmatprep.subr.mxu0 0.0
    %176 = vmatpush1.msra.mxu0 0.0
    %177 = vmatprep.subr.mxu0 0.0
    %178 = vmatpush1.msra.mxu0 0.0
    %179 = vmatprep.subr.mxu0 0.0
    %180 = vmatpush1.msra.mxu0 0.0
    %181 = vmatprep.subr.mxu0 0.0
    %182 = vmatpush1.msra.mxu0 0.0
    %183 = vmatprep.subr.mxu0 0.0
    %184 = vmatpush1.msra.mxu0 0.0
    %185 = vmatprep.subr.mxu0 0.0
    %186 = vmatpush1.msra.mxu0 0.0
    %187 = vmatprep.subr.mxu0 0.0
    %188 = vmatpush1.msra.mxu0 0.0
    %189 = vmatprep.subr.mxu0 0.0
    %190 = vmatpush1.msra.mxu0 0.0
    %191 = vmatprep.subr.mxu0 0.0
    %192 = vmatpush1.msra.mxu0 0.0
    %193 = vmatprep.subr.mxu0 0.0
    %194 = vmatpush1.msra.mxu0 0.0
    %195 = vmatprep.subr.mxu0 0.0
    %196 = vmatpush1.msra.mxu0 0.0
    %197 = vmatprep.subr.mxu0 0.0
    %198 = vmatpush1.msra.mxu0 0.0
    %199 = vmatprep.subr.mxu0 0.0
    %200 = vmatpush1.msra.mxu0 0.0
    %201 = vmatprep.subr.mxu0 0.0
    %202 = vmatpush1.msra.mxu0 0.0
    %203 = vmatprep.subr.mxu0 0.0
    %204 = vmatpush1.msra.mxu0 0.0
    %205 = vmatprep.mubr.f32.mxu0 0.0
    %206 = vmatmul.mubr.f32.gmra.mrb[0].mxu0 %v116
    %v207 = vpop.f32.mrb[0].mxu0
    %v208 = vadd.f32 %v139, %v207
    %v209 = vpop.f32.mrb[0].mxu0
    %210 = vmatprep.mubr.f32.mxu0 0.0
    %211 = vmatmul.mubr.f32.gmra.mrb[0].mxu0 %v117
    %v212 = vpop.f32.mrb[0].mxu0
    %v213 = vadd.f32 %v139, %v212
    %v214 = vpop.f32.mrb[0].mxu0
    %215 = vdwg.mxu0
    %216 = vst.msk [vmem:[#allocation2] sm:$0xff] %vm34, %v208
    %217 = vst.msk [vmem:[#allocation2 + $0x8] sm:$0xff] %vm34, %v213
    // Predicated region
    $region22: #{tpu_custom_call.1} parent=1 // pred_check
      _
    $region23: #{tpu_custom_call.1} parent=1 // pred_check_branch
      %219 = sbr.rel (0) target = $region25
    $region24: #{tpu_custom_call.1} parent=1 // pred_region
      %s221 = ssub.s32 256, 256
      %222 = vsyncadd [#allocation3], %s221
      %s223 = sshll.u32 [#allocation2], 4
      %s224 = int_to_ptr.vmem [resolvable:$true] %s223
      %229 = dma.vmem_to_hbm [thread:$0]  %s224, 256, %s5, [#allocation3], 128, 128, 8
    $region25: #{tpu_custom_call.1} parent=1 // pred_fallthru
      _
    // Predicated region
    $region26: #{tpu_custom_call.1} parent=1 // pred_check
      _
    $region27: #{tpu_custom_call.1} parent=1 // pred_check_branch
      %231 = sbr.rel (0) target = $region29
    $region28: #{tpu_custom_call.1} parent=1 // pred_region
      %232 = dma.done [#allocation3], 256
    $region29: #{tpu_custom_call.1} parent=1 // pred_fallthru
      _
    %233 = vsyncpa [#allocation3], 1

</llo_original>
